<compile_context>
chip_gen: v7x
topology: tpu7x:2x2x1
jax: 0.10.0
libtpu: 0.0.40
codegen_flags: <defaults>
</compile_context>

<pallas_src>
import functools

import jax
import jax.numpy as jnp
from jax.experimental import pallas as pl
from jax.experimental.pallas import tpu as pltpu


def _round_up(v, m):
    return ((v + m - 1) // m) * m


def _focal_dice_kernel(x_ref, t_ref, out_ref, facc, iacc, cacc, tacc,
                       *, num_classes, ignore_index, gamma):
    n = pl.program_id(1)   # batch index   (arbitrary)
    j = pl.program_id(2)   # lane-block    (arbitrary)
    # program_id(0) is the TensorCore split ("parallel"); each core has its own
    # scratch accumulators and its own output block, so it never appears here.

    @pl.when((n == 0) & (j == 0))
    def _init():
        facc[...] = jnp.zeros_like(facc)
        iacc[...] = jnp.zeros_like(iacc)
        cacc[...] = jnp.zeros_like(cacc)
        tacc[...] = jnp.zeros_like(tacc)

    x = x_ref[...].astype(jnp.float32)                 # (C, TP) logits (bf16 -> f32 in-kernel)
    t = t_ref[...]                                     # (1, TP) int32 labels
    tp = x.shape[1]

    valid = (t != ignore_index).astype(jnp.float32)    # (1, TP)
    cls_ids = jax.lax.broadcasted_iota(jnp.int32, (num_classes, tp), 0)
    onehot = (t == cls_ids).astype(jnp.float32)        # (C, TP)

    # ---------- Focal loss (per-class BCE-with-logits, gamma=2, alpha=None) ----------
    e = jnp.exp(-jnp.abs(x))                           # single shared transcendental
    z = x * (2.0 * onehot - 1.0)                       # = x if y==1 else -x ; |z| == |x|
    # logpt = softplus(-z) = max(-z,0) + log1p(e).  Since e = exp(-|x|) in [0,1],
    # log(1+e) matches log1p(e) to <= ~1.2e-7 absolute (argument is in [1,2]), so the
    # plain log form is numerically safe here and avoids an unsupported-lowering risk.
    logpt = jnp.maximum(-z, 0.0) + jnp.log(1.0 + e)
    inv_1pe = pl.reciprocal(1.0 + e)                   # exact reciprocal
    pt = jnp.where(z >= 0.0, inv_1pe, e * inv_1pe)     # sigmoid(z), reusing e (no 2nd exp)
    if gamma == 2.0:
        focal_term = jnp.square(1.0 - pt)              # no pow -> log+exp
    else:
        focal_term = (1.0 - pt) ** gamma
    facc[...] += jnp.sum(focal_term * logpt * valid, axis=0, keepdims=True)

    # ---------- Dice loss (softmax over classes, masked, per-class dice) ----------
    xmax = jnp.max(x, axis=0, keepdims=True)
    ex = jnp.exp(x - xmax)
    p = ex * pl.reciprocal(jnp.sum(ex, axis=0, keepdims=True))   # softmax over class axis
    p = p * valid                                      # zero predictions on ignored pixels
    oh = onehot * valid                                # zero targets on ignored pixels

    iacc[...] += p * oh                                # intersection contributions
    cacc[...] += p + oh                                # cardinality contributions
    tacc[...] += oh                                    # true-pixel counts per class

    @pl.when((n == pl.num_programs(1) - 1) & (j == pl.num_programs(2) - 1))
    def _finalize():
        inter = jnp.sum(iacc[...], axis=1, keepdims=True)   # (C, 1)
        card = jnp.sum(cacc[...], axis=1, keepdims=True)    # (C, 1)
        tcnt = jnp.sum(tacc[...], axis=1, keepdims=True)    # (C, 1)  (sum == n_valid)
        fsum = jnp.sum(facc[...], keepdims=True)            # (1, 1)
        z128 = jnp.zeros((num_classes, 128), jnp.float32)   # lane-dense (>=128) output rows
        out_ref[0, :, :] = inter + z128
        out_ref[1, :, :] = card + z128
        out_ref[2, :, :] = tcnt + z128
        out_ref[3, :, :] = fsum + z128


def focal_dice_loss(preds, targets, *, ignore_index=0, gamma=2.0, eps=1e-7, tile=2048):
    """preds: (N, C, H, W) float logits; targets: (N, H, W) int labels. Returns scalar loss."""
    N, C, H, W = preds.shape
    HW = H * W

    if preds.dtype not in (jnp.float32, jnp.bfloat16):
        preds = preds.astype(jnp.float32)              # keep bf16 as-is (half the HBM bytes)
    x = preds.reshape(N, C, HW)                        # free reshape; NO transpose pass
    t = targets.reshape(N, 1, HW).astype(jnp.int32)

    assert tile % 128 == 0, "tile must be a multiple of 128"
    tile = min(tile, _round_up(HW, 128))               # don't over-pad tiny inputs
    hw_pad = _round_up(HW, 2 * tile)                   # even #blocks -> clean 2-core split
    if hw_pad != HW:
        x = jnp.pad(x, ((0, 0), (0, 0), (0, hw_pad - HW)))
        t = jnp.pad(t, ((0, 0), (0, 0), (0, hw_pad - HW)), constant_values=ignore_index)
    half = (hw_pad // tile) // 2                       # lane-blocks per core

    kernel = functools.partial(
        _focal_dice_kernel, num_classes=C, ignore_index=ignore_index, gamma=gamma)

    stats = pl.pallas_call(
        kernel,
        out_shape=jax.ShapeDtypeStruct((2, 4, C, 128), jnp.float32),
        grid_spec=pltpu.PrefetchScalarGridSpec(
            num_scalar_prefetch=0,
            grid=(2, N, half),                         # (core-split, batch, lane-block)
            in_specs=[
                pl.BlockSpec((None, C, tile), lambda c, n, j: (n, 0, c * half + j)),
                pl.BlockSpec((None, 1, tile), lambda c, n, j: (n, 0, c * half + j)),
            ],
            out_specs=pl.BlockSpec((None, 4, C, 128), lambda c, n, j: (c, 0, 0, 0)),
            scratch_shapes=[
                pltpu.VMEM((1, tile), jnp.float32),    # focal partial sums (per lane)
                pltpu.VMEM((C, tile), jnp.float32),    # dice intersection
                pltpu.VMEM((C, tile), jnp.float32),    # dice cardinality
                pltpu.VMEM((C, tile), jnp.float32),    # true-pixel count per class
            ],
        ),
        compiler_params=pltpu.CompilerParams(
            dimension_semantics=("parallel", "arbitrary", "arbitrary")),
    )(x, t)

    # Trivial final combine in JAX (per-core partial sums; stats broadcast across lanes).
    per_core = stats[:, :, :, 0]                       # (2, 4, C)
    inter = jnp.sum(per_core[:, 0, :], axis=0)         # (C,)
    card = jnp.sum(per_core[:, 1, :], axis=0)          # (C,)
    tcnt = jnp.sum(per_core[:, 2, :], axis=0)          # (C,)
    fsum = jnp.sum(per_core[:, 3, 0])                  # scalar
    n_valid = jnp.sum(tcnt)

    focal_loss = fsum / jnp.maximum(n_valid, 1.0)      # guard all-ignored case
    dice = 2.0 * inter / jnp.maximum(card, eps)        # smooth=0, clamp_min(eps)
    dice_loss = jnp.mean((1.0 - dice) * (tcnt > 0).astype(jnp.float32))
    return focal_loss + dice_loss


def focal_dice_loss_ref(preds, targets, *, ignore_index=0, gamma=2.0, eps=1e-7):
    """Pure-JAX reference mirroring smp FocalLoss + DiceLoss (multiclass, ignore_index)."""
    N, C, H, W = preds.shape
    x = preds.reshape(N, C, H * W).astype(jnp.float32)
    t = targets.reshape(N, H * W)
    valid = (t != ignore_index).astype(jnp.float32)[:, None, :]      # (N,1,HW)
    onehot = jax.nn.one_hot(t, C, axis=1, dtype=jnp.float32)         # (N,C,HW)

    logpt = jnp.maximum(x, 0.0) - x * onehot + jnp.log1p(jnp.exp(-jnp.abs(x)))
    pt = jnp.exp(-logpt)
    focal = ((1.0 - pt) ** gamma) * logpt * valid
    focal_loss = jnp.sum(focal) / jnp.sum(valid[:, 0, :])

    p = jax.nn.softmax(x, axis=1) * valid
    oh = onehot * valid
    inter = jnp.sum(p * oh, axis=(0, 2))
    card = jnp.sum(p + oh, axis=(0, 2))
    dice = 2.0 * inter / jnp.maximum(card, eps)
    mask = (jnp.sum(oh, axis=(0, 2)) > 0).astype(jnp.float32)
    dice_loss = jnp.mean((1.0 - dice) * mask)
    return focal_loss + dice_loss


if __name__ == "__main__":
    key = jax.random.PRNGKey(0)
    k1, k2 = jax.random.split(key)

    N, C, H, W = 2, 4, 16, 16
    preds = jax.random.normal(k1, (N, C, H, W), dtype=jnp.float32)
    targets = jax.random.randint(k2, (N, H, W), 0, C, dtype=jnp.int32)

    loss = focal_dice_loss(preds, targets)
    loss = jax.block_until_ready(loss)

    ref = jax.block_until_ready(focal_dice_loss_ref(preds, targets))
    assert jnp.isfinite(loss), "loss is not finite"
    assert jnp.allclose(loss, ref, rtol=1e-4, atol=1e-5), (loss, ref)

    print("KERNEL_OK")
</pallas_src>

<mosaic_0001>
module attributes {stable_mosaic.version = 11 : i64} {
  func.func @_focal_dice_kernel(%arg0: i32, %arg1: i32, %arg2: i32, %arg3: memref<1x4x256xf32, #tpu.memory_space<vmem>>, %arg4: memref<1x1x256xi32, #tpu.memory_space<vmem>>, %arg5: memref<1x4x4x128xf32, #tpu.memory_space<vmem>>, %arg6: memref<1x256xf32, #tpu.memory_space<vmem>>, %arg7: memref<4x256xf32, #tpu.memory_space<vmem>>, %arg8: memref<4x256xf32, #tpu.memory_space<vmem>>, %arg9: memref<4x256xf32, #tpu.memory_space<vmem>>) attributes {dimension_semantics = [#tpu.dimension_semantics<parallel>, #tpu.dimension_semantics<arbitrary>, #tpu.dimension_semantics<arbitrary>], iteration_bounds = array<i64: 2, 2, 1>, scalar_prefetch = 0 : i64, scratch_operands = 4 : i64, tpu.core_type = #tpu.core_type<tc>, window_params = [{transform_indices = @transform_0, window_bounds = array<i64: 1, 4, 256>}, {transform_indices = @transform_1, window_bounds = array<i64: 1, 1, 256>}, {transform_indices = @transform_2, window_bounds = array<i64: 1, 4, 4, 128>}]} {
    %c0_i32 = arith.constant 0 : i32
    %0 = arith.cmpi eq, %arg1, %c0_i32 : i32
    %c0_i32_0 = arith.constant 0 : i32
    %1 = arith.cmpi eq, %arg2, %c0_i32_0 : i32
    %2 = arith.andi %0, %1 : i1
    %3 = arith.extui %2 : i1 to i32
    %c0_i32_1 = arith.constant 0 : i32
    %4 = arith.cmpi ne, %3, %c0_i32_1 : i32
    scf.if %4 {
      %cst_37 = arith.constant 0.000000e+00 : f32
      %83 = vector.broadcast %cst_37 : f32 to vector<1x256xf32>
      %c0_38 = arith.constant 0 : index
      %c0_39 = arith.constant 0 : index
      %84 = vector.load %arg6[%c0_38, %c0_39] : memref<1x256xf32, #tpu.memory_space<vmem>>, vector<1x256xf32>
      tpu.vector_store %arg6[%c0_38, %c0_39], %83 {strides = array<i32>} : memref<1x256xf32, #tpu.memory_space<vmem>>, vector<1x256xf32>,
      %cst_40 = arith.constant 0.000000e+00 : f32
      %85 = vector.broadcast %cst_40 : f32 to vector<4x256xf32>
      %c0_41 = arith.constant 0 : index
      %c0_42 = arith.constant 0 : index
      %86 = vector.load %arg7[%c0_41, %c0_42] : memref<4x256xf32, #tpu.memory_space<vmem>>, vector<4x256xf32>
      tpu.vector_store %arg7[%c0_41, %c0_42], %85 {strides = array<i32>} : memref<4x256xf32, #tpu.memory_space<vmem>>, vector<4x256xf32>,
      %cst_43 = arith.constant 0.000000e+00 : f32
      %87 = vector.broadcast %cst_43 : f32 to vector<4x256xf32>
      %c0_44 = arith.constant 0 : index
      %c0_45 = arith.constant 0 : index
      %88 = vector.load %arg8[%c0_44, %c0_45] : memref<4x256xf32, #tpu.memory_space<vmem>>, vector<4x256xf32>
      tpu.vector_store %arg8[%c0_44, %c0_45], %87 {strides = array<i32>} : memref<4x256xf32, #tpu.memory_space<vmem>>, vector<4x256xf32>,
      %cst_46 = arith.constant 0.000000e+00 : f32
      %89 = vector.broadcast %cst_46 : f32 to vector<4x256xf32>
      %c0_47 = arith.constant 0 : index
      %c0_48 = arith.constant 0 : index
      %90 = vector.load %arg9[%c0_47, %c0_48] : memref<4x256xf32, #tpu.memory_space<vmem>>, vector<4x256xf32>
      tpu.vector_store %arg9[%c0_47, %c0_48], %89 {strides = array<i32>} : memref<4x256xf32, #tpu.memory_space<vmem>>, vector<4x256xf32>,
    } else {
    }
    %c0 = arith.constant 0 : index
    %c0_2 = arith.constant 0 : index
    %c0_3 = arith.constant 0 : index
    %5 = vector.load %arg3[%c0, %c0_2, %c0_3] : memref<1x4x256xf32, #tpu.memory_space<vmem>>, vector<1x4x256xf32>
    %6 = vector.shape_cast %5 : vector<1x4x256xf32> to vector<4x256xf32>
    %c0_4 = arith.constant 0 : index
    %c0_5 = arith.constant 0 : index
    %c0_6 = arith.constant 0 : index
    %7 = vector.load %arg4[%c0_4, %c0_5, %c0_6] : memref<1x1x256xi32, #tpu.memory_space<vmem>>, vector<1x1x256xi32>
    %8 = vector.shape_cast %7 : vector<1x1x256xi32> to vector<1x256xi32>
    %c0_i32_7 = arith.constant 0 : i32
    %9 = vector.broadcast %c0_i32_7 : i32 to vector<1x256xi32>
    %10 = arith.cmpi ne, %8, %9 : vector<1x256xi32>
    %11 = arith.extui %10 : vector<1x256xi1> to vector<1x256xi32>
    %12 = arith.sitofp %11 : vector<1x256xi32> to vector<1x256xf32>
    %13 = tpu.iota {dimensions = array<i32: 0>} : vector<4x256xi32>
    %14 = vector.broadcast %8 : vector<1x256xi32> to vector<4x256xi32>
    %15 = arith.cmpi eq, %14, %13 : vector<4x256xi32>
    %16 = arith.extui %15 : vector<4x256xi1> to vector<4x256xi32>
    %17 = arith.sitofp %16 : vector<4x256xi32> to vector<4x256xf32>
    %18 = math.absf %6 : vector<4x256xf32>
    %cst = arith.constant 0.000000e+00 : f32
    %19 = vector.broadcast %cst : f32 to vector<4x256xf32>
    %20 = arith.subf %19, %18 : vector<4x256xf32>
    %21 = math.exp %20 : vector<4x256xf32>
    %cst_8 = arith.constant 2.000000e+00 : f32
    %22 = vector.broadcast %cst_8 : f32 to vector<4x256xf32>
    %23 = arith.mulf %22, %17 : vector<4x256xf32>
    %cst_9 = arith.constant 1.000000e+00 : f32
    %24 = vector.broadcast %cst_9 : f32 to vector<4x256xf32>
    %25 = arith.subf %23, %24 : vector<4x256xf32>
    %26 = arith.mulf %6, %25 : vector<4x256xf32>
    %cst_10 = arith.constant 0.000000e+00 : f32
    %27 = vector.broadcast %cst_10 : f32 to vector<4x256xf32>
    %28 = arith.subf %27, %26 : vector<4x256xf32>
    %cst_11 = arith.constant 0.000000e+00 : f32
    %29 = vector.broadcast %cst_11 : f32 to vector<4x256xf32>
    %30 = arith.maximumf %28, %29 : vector<4x256xf32>
    %cst_12 = arith.constant 1.000000e+00 : f32
    %31 = vector.broadcast %cst_12 : f32 to vector<4x256xf32>
    %32 = arith.addf %31, %21 : vector<4x256xf32>
    %33 = math.log %32 : vector<4x256xf32>
    %34 = arith.addf %30, %33 : vector<4x256xf32>
    %cst_13 = arith.constant 1.000000e+00 : f32
    %35 = vector.broadcast %cst_13 : f32 to vector<4x256xf32>
    %36 = arith.addf %35, %21 : vector<4x256xf32>
    %37 = tpu.reciprocal %36 : vector<4x256xf32> -> vector<4x256xf32>
    %cst_14 = arith.constant 0.000000e+00 : f32
    %38 = vector.broadcast %cst_14 : f32 to vector<4x256xf32>
    %39 = arith.cmpf oge, %26, %38 : vector<4x256xf32>
    %40 = arith.mulf %21, %37 : vector<4x256xf32>
    %41 = arith.select %39, %37, %40 : vector<4x256xi1>, vector<4x256xf32>
    %cst_15 = arith.constant 1.000000e+00 : f32
    %42 = vector.broadcast %cst_15 : f32 to vector<4x256xf32>
    %43 = arith.subf %42, %41 : vector<4x256xf32>
    %44 = arith.mulf %43, %43 : vector<4x256xf32>
    %c0_16 = arith.constant 0 : index
    %c0_17 = arith.constant 0 : index
    %45 = vector.load %arg6[%c0_16, %c0_17] : memref<1x256xf32, #tpu.memory_space<vmem>>, vector<1x256xf32>
    %46 = arith.mulf %44, %34 : vector<4x256xf32>
    %47 = vector.broadcast %12 : vector<1x256xf32> to vector<4x256xf32>
    %48 = arith.mulf %46, %47 : vector<4x256xf32>
    %cst_18 = arith.constant dense<0.000000e+00> : vector<256xf32>
    %49 = vector.multi_reduction <add>, %48, %cst_18 [0] : vector<4x256xf32> to vector<256xf32>
    %50 = vector.shape_cast %49 : vector<256xf32> to vector<1x256xf32>
    %51 = arith.addf %45, %50 : vector<1x256xf32>
    %c0_19 = arith.constant 0 : index
    %c0_20 = arith.constant 0 : index
    %52 = vector.load %arg6[%c0_19, %c0_20] : memref<1x256xf32, #tpu.memory_space<vmem>>, vector<1x256xf32>
    tpu.vector_store %arg6[%c0_19, %c0_20], %51 {strides = array<i32>} : memref<1x256xf32, #tpu.memory_space<vmem>>, vector<1x256xf32>,
    %cst_21 = arith.constant dense<0xFF800000> : vector<256xf32>
    %53 = vector.multi_reduction <maximumf>, %6, %cst_21 [0] : vector<4x256xf32> to vector<256xf32>
    %54 = vector.shape_cast %53 : vector<256xf32> to vector<1x256xf32>
    %55 = vector.broadcast %54 : vector<1x256xf32> to vector<4x256xf32>
    %56 = arith.subf %6, %55 : vector<4x256xf32>
    %57 = math.exp %56 : vector<4x256xf32>
    %cst_22 = arith.constant dense<0.000000e+00> : vector<256xf32>
    %58 = vector.multi_reduction <add>, %57, %cst_22 [0] : vector<4x256xf32> to vector<256xf32>
    %59 = vector.shape_cast %58 : vector<256xf32> to vector<1x256xf32>
    %60 = tpu.reciprocal %59 : vector<1x256xf32> -> vector<1x256xf32>
    %61 = vector.broadcast %60 : vector<1x256xf32> to vector<4x256xf32>
    %62 = arith.mulf %57, %61 : vector<4x256xf32>
    %63 = vector.broadcast %12 : vector<1x256xf32> to vector<4x256xf32>
    %64 = arith.mulf %62, %63 : vector<4x256xf32>
    %65 = vector.broadcast %12 : vector<1x256xf32> to vector<4x256xf32>
    %66 = arith.mulf %17, %65 : vector<4x256xf32>
    %c0_23 = arith.constant 0 : index
    %c0_24 = arith.constant 0 : index
    %67 = vector.load %arg7[%c0_23, %c0_24] : memref<4x256xf32, #tpu.memory_space<vmem>>, vector<4x256xf32>
    %68 = arith.mulf %64, %66 : vector<4x256xf32>
    %69 = arith.addf %67, %68 : vector<4x256xf32>
    %c0_25 = arith.constant 0 : index
    %c0_26 = arith.constant 0 : index
    %70 = vector.load %arg7[%c0_25, %c0_26] : memref<4x256xf32, #tpu.memory_space<vmem>>, vector<4x256xf32>
    tpu.vector_store %arg7[%c0_25, %c0_26], %69 {strides = array<i32>} : memref<4x256xf32, #tpu.memory_space<vmem>>, vector<4x256xf32>,
    %c0_27 = arith.constant 0 : index
    %c0_28 = arith.constant 0 : index
    %71 = vector.load %arg8[%c0_27, %c0_28] : memref<4x256xf32, #tpu.memory_space<vmem>>, vector<4x256xf32>
    %72 = arith.addf %64, %66 : vector<4x256xf32>
    %73 = arith.addf %71, %72 : vector<4x256xf32>
    %c0_29 = arith.constant 0 : index
    %c0_30 = arith.constant 0 : index
    %74 = vector.load %arg8[%c0_29, %c0_30] : memref<4x256xf32, #tpu.memory_space<vmem>>, vector<4x256xf32>
    tpu.vector_store %arg8[%c0_29, %c0_30], %73 {strides = array<i32>} : memref<4x256xf32, #tpu.memory_space<vmem>>, vector<4x256xf32>,
    %c0_31 = arith.constant 0 : index
    %c0_32 = arith.constant 0 : index
    %75 = vector.load %arg9[%c0_31, %c0_32] : memref<4x256xf32, #tpu.memory_space<vmem>>, vector<4x256xf32>
    %76 = arith.addf %75, %66 : vector<4x256xf32>
    %c0_33 = arith.constant 0 : index
    %c0_34 = arith.constant 0 : index
    %77 = vector.load %arg9[%c0_33, %c0_34] : memref<4x256xf32, #tpu.memory_space<vmem>>, vector<4x256xf32>
    tpu.vector_store %arg9[%c0_33, %c0_34], %76 {strides = array<i32>} : memref<4x256xf32, #tpu.memory_space<vmem>>, vector<4x256xf32>,
    %c1_i32 = arith.constant 1 : i32
    %78 = arith.cmpi eq, %arg1, %c1_i32 : i32
    %c0_i32_35 = arith.constant 0 : i32
    %79 = arith.cmpi eq, %arg2, %c0_i32_35 : i32
    %80 = arith.andi %78, %79 : i1
    %81 = arith.extui %80 : i1 to i32
    %c0_i32_36 = arith.constant 0 : i32
    %82 = arith.cmpi ne, %81, %c0_i32_36 : i32
    scf.if %82 {
      %c0_37 = arith.constant 0 : index
      %c0_38 = arith.constant 0 : index
      %83 = vector.load %arg7[%c0_37, %c0_38] : memref<4x256xf32, #tpu.memory_space<vmem>>, vector<4x256xf32>
      %cst_39 = arith.constant dense<0.000000e+00> : vector<4xf32>
      %84 = vector.multi_reduction <add>, %83, %cst_39 [1] : vector<4x256xf32> to vector<4xf32>
      %85 = vector.shape_cast %84 : vector<4xf32> to vector<4x1xf32>
      %c0_40 = arith.constant 0 : index
      %c0_41 = arith.constant 0 : index
      %86 = vector.load %arg8[%c0_40, %c0_41] : memref<4x256xf32, #tpu.memory_space<vmem>>, vector<4x256xf32>
      %cst_42 = arith.constant dense<0.000000e+00> : vector<4xf32>
      %87 = vector.multi_reduction <add>, %86, %cst_42 [1] : vector<4x256xf32> to vector<4xf32>
      %88 = vector.shape_cast %87 : vector<4xf32> to vector<4x1xf32>
      %c0_43 = arith.constant 0 : index
      %c0_44 = arith.constant 0 : index
      %89 = vector.load %arg9[%c0_43, %c0_44] : memref<4x256xf32, #tpu.memory_space<vmem>>, vector<4x256xf32>
      %cst_45 = arith.constant dense<0.000000e+00> : vector<4xf32>
      %90 = vector.multi_reduction <add>, %89, %cst_45 [1] : vector<4x256xf32> to vector<4xf32>
      %91 = vector.shape_cast %90 : vector<4xf32> to vector<4x1xf32>
      %c0_46 = arith.constant 0 : index
      %c0_47 = arith.constant 0 : index
      %92 = vector.load %arg6[%c0_46, %c0_47] : memref<1x256xf32, #tpu.memory_space<vmem>>, vector<1x256xf32>
      %93 = vector.shape_cast %92 : vector<1x256xf32> to vector<1x1x256xf32>
      %cst_48 = arith.constant dense<0.000000e+00> : vector<1xf32>
      %94 = vector.multi_reduction <add>, %93, %cst_48 [1, 2] : vector<1x1x256xf32> to vector<1xf32>
      %95 = vector.shape_cast %94 : vector<1xf32> to vector<1x1x1xf32>
      %96 = vector.extract %95[0, 0, 0] : f32 from vector<1x1x1xf32>
      %97 = vector.broadcast %96 : f32 to vector<1x1xf32>
      %cst_49 = arith.constant 0.000000e+00 : f32
      %98 = vector.broadcast %cst_49 : f32 to vector<4x128xf32>
      %99 = vector.broadcast %85 : vector<4x1xf32> to vector<4x128xf32>
      %100 = arith.addf %99, %98 : vector<4x128xf32>
      %c0_50 = arith.constant 0 : index
      %c0_51 = arith.constant 0 : index
      %c0_52 = arith.constant 0 : index
      %c0_53 = arith.constant 0 : index
      %101 = vector.load %arg5[%c0_50, %c0_51, %c0_52, %c0_53] : memref<1x4x4x128xf32, #tpu.memory_space<vmem>>, vector<1x1x4x128xf32>
      %102 = vector.shape_cast %101 : vector<1x1x4x128xf32> to vector<4x128xf32>
      %103 = vector.shape_cast %100 : vector<4x128xf32> to vector<1x1x4x128xf32>
      tpu.vector_store %arg5[%c0_50, %c0_51, %c0_52, %c0_53], %103 {strides = array<i32>} : memref<1x4x4x128xf32, #tpu.memory_space<vmem>>, vector<1x1x4x128xf32>,
      %104 = vector.broadcast %88 : vector<4x1xf32> to vector<4x128xf32>
      %105 = arith.addf %104, %98 : vector<4x128xf32>
      %c0_54 = arith.constant 0 : index
      %c1 = arith.constant 1 : index
      %c0_55 = arith.constant 0 : index
      %c0_56 = arith.constant 0 : index
      %106 = vector.load %arg5[%c0_54, %c1, %c0_55, %c0_56] : memref<1x4x4x128xf32, #tpu.memory_space<vmem>>, vector<1x1x4x128xf32>
      %107 = vector.shape_cast %106 : vector<1x1x4x128xf32> to vector<4x128xf32>
      %108 = vector.shape_cast %105 : vector<4x128xf32> to vector<1x1x4x128xf32>
      tpu.vector_store %arg5[%c0_54, %c1, %c0_55, %c0_56], %108 {strides = array<i32>} : memref<1x4x4x128xf32, #tpu.memory_space<vmem>>, vector<1x1x4x128xf32>,
      %109 = vector.broadcast %91 : vector<4x1xf32> to vector<4x128xf32>
      %110 = arith.addf %109, %98 : vector<4x128xf32>
      %c0_57 = arith.constant 0 : index
      %c2 = arith.constant 2 : index
      %c0_58 = arith.constant 0 : index
      %c0_59 = arith.constant 0 : index
      %111 = vector.load %arg5[%c0_57, %c2, %c0_58, %c0_59] : memref<1x4x4x128xf32, #tpu.memory_space<vmem>>, vector<1x1x4x128xf32>
      %112 = vector.shape_cast %111 : vector<1x1x4x128xf32> to vector<4x128xf32>
      %113 = vector.shape_cast %110 : vector<4x128xf32> to vector<1x1x4x128xf32>
      tpu.vector_store %arg5[%c0_57, %c2, %c0_58, %c0_59], %113 {strides = array<i32>} : memref<1x4x4x128xf32, #tpu.memory_space<vmem>>, vector<1x1x4x128xf32>,
      %114 = vector.broadcast %97 : vector<1x1xf32> to vector<4x128xf32>
      %115 = arith.addf %114, %98 : vector<4x128xf32>
      %c0_60 = arith.constant 0 : index
      %c3 = arith.constant 3 : index
      %c0_61 = arith.constant 0 : index
      %c0_62 = arith.constant 0 : index
      %116 = vector.load %arg5[%c0_60, %c3, %c0_61, %c0_62] : memref<1x4x4x128xf32, #tpu.memory_space<vmem>>, vector<1x1x4x128xf32>
      %117 = vector.shape_cast %116 : vector<1x1x4x128xf32> to vector<4x128xf32>
      %118 = vector.shape_cast %115 : vector<4x128xf32> to vector<1x1x4x128xf32>
      tpu.vector_store %arg5[%c0_60, %c3, %c0_61, %c0_62], %118 {strides = array<i32>} : memref<1x4x4x128xf32, #tpu.memory_space<vmem>>, vector<1x1x4x128xf32>,
    } else {
    }
    return
  }
  func.func @transform_0(%arg0: i32, %arg1: i32, %arg2: i32) -> (i32, i32, i32) {
    %c1_i32 = arith.constant 1 : i32
    %0 = arith.muli %arg0, %c1_i32 : i32
    %1 = arith.addi %0, %arg2 : i32
    %c0_i32 = arith.constant 0 : i32
    %c0_i32_0 = arith.constant 0 : i32
    return %arg1, %c0_i32, %1 : i32, i32, i32
  }
  func.func @transform_1(%arg0: i32, %arg1: i32, %arg2: i32) -> (i32, i32, i32) {
    %c1_i32 = arith.constant 1 : i32
    %0 = arith.muli %arg0, %c1_i32 : i32
    %1 = arith.addi %0, %arg2 : i32
    %c0_i32 = arith.constant 0 : i32
    %c0_i32_0 = arith.constant 0 : i32
    return %arg1, %c0_i32, %1 : i32, i32, i32
  }
  func.func @transform_2(%arg0: i32, %arg1: i32, %arg2: i32) -> (i32, i32, i32, i32) {
    %c0_i32 = arith.constant 0 : i32
    %c0_i32_0 = arith.constant 0 : i32
    %c0_i32_1 = arith.constant 0 : i32
    %c0_i32_2 = arith.constant 0 : i32
    return %arg0, %c0_i32, %c0_i32_0, %c0_i32_1 : i32, i32, i32, i32
  }
}

</mosaic_0001>

<llo_original>
// kernel: tpu_custom_call.1
$region0: #{tpu_custom_call.1}
  #allocation0 [shape = 'u32[]', space=smem, size = 0x4, offset = 0x4, fixed_abs, tag = 'smem constant byte address 0x4 - core index']
  #allocation1 [shape = 'u32[144,128]{1,0:T(1,128)}', space=vmem, size = 0x12000, scoped, tag = 'internal scratch']
  #allocation2 [shape = 'f32[1,256]{1,0:T(1,128)}', space=vmem, size = 0x400, scoped, tag = 'scratch operand']
  #allocation3 [shape = 'f32[4,256]{1,0:T(4,128)}', space=vmem, size = 0x1000, scoped, tag = 'scratch operand']
  #allocation4 [shape = 'f32[4,256]{1,0:T(4,128)}', space=vmem, size = 0x1000, scoped, tag = 'scratch operand']
  #allocation5 [shape = 'f32[4,256]{1,0:T(4,128)}', space=vmem, size = 0x1000, scoped, tag = 'scratch operand']
  %s0 = inlined_call_operand.hbm [shape: f32[2,4,512], index: 0, kind: input, shape index: {}]
  %s1 = inlined_call_operand.hbm [shape: s32[2,1,512], index: 1, kind: input, shape index: {}]
  %s2 = inlined_call_operand.hbm [shape: f32[2,4,4,128], index: 2, kind: output, shape index: {}]
  %s3 = sld [smem:[#allocation0]]
  $region57: #{tpu_custom_call.1} parent=0
    _
  %s5 = ssub.s32 1, %s3
  %s6 = scalar_select 0, %s5, %s3
  $region1: #{tpu_custom_call.1} parent=0
    #allocation6 [shape = 'u8[8192]{0}', space=vmem, size = 0x2000, scoped, tag = 'input window, operand 0']
    #allocation7 [shape = 's32[2]{0}', space=sflag, size = 0x8, scoped, tag = 'scoped memory for tpu_custom_call.1']
    #allocation8 [shape = 's32[2]{0}', space=sflag, size = 0x8, scoped, tag = 'scoped memory for tpu_custom_call.1']
    #allocation9 [shape = 'u8[2048]{0}', space=vmem, size = 0x800, scoped, tag = 'input window, operand 1']
    #allocation10 [shape = 's32[2]{0}', space=sflag, size = 0x8, scoped, tag = 'scoped memory for tpu_custom_call.1']
    #allocation11 [shape = 'u8[16384]{0}', space=vmem, size = 0x4000, scoped, tag = 'output window, operand 0']
    %7 = vsyncpa [#allocation7], 0
    %s8 = scalar_lea.sflag [#allocation7], 1
    %9 = vsyncpa %s8, 0
    %10 = vsyncpa [#allocation10], 0
    %s11 = scalar_lea.sflag [#allocation10], 1
    %12 = vsyncpa %s11, 0
    %13 = vsyncpa [#allocation8], 0
    %s14 = scalar_lea.sflag [#allocation8], 1
    %15 = vsyncpa %s14, 0
    loop: start=0, step=1, limit=6
    $region2: #{tpu_custom_call.1} parent=1 // loop_pre_header
      _
    $region3: #{tpu_custom_call.1} parent=1 // loop_header
      %s17 = sphi 0, %s21
      %p18 = scmp.ge.s32.totalorder %s17, 6
      %s24 = sphi 0, %s43
      %s25 = sphi 0, %s39
      %s26 = sphi 0, %s35
      %s27 = sphi 0, %s24
      %s28 = sphi 0, %s25
      %s29 = sphi 0, %s26
      %s30 = sphi 0, %s27
      %s31 = sphi 0, %s28
      %s32 = sphi 0, %s29
      %s50 = sphi 0, %s52
      %s53 = sphi 0, %s50
      %s54 = sphi 0, %s53
      %s70 = sphi 0, %s54
      %s80 = sphi 0, %s82
      %s83 = sphi 0, %s80
      %s84 = sphi 0, %s83
      %s100 = sphi 0, %s84
      %s106 = sphi 0, %s108
      %s109 = sphi 0, %s106
      %s110 = sphi 0, %s109
      %s126 = sphi 0, %s110
    $region4: #{tpu_custom_call.1} parent=1 // loop_header_branch
      %20 = sbr.rel (%p18) target = $region8
    $region5: #{tpu_custom_call.1} parent=1 // loop_body
      %s22 = ssub.s32 %s17, 1
      %s23 = ssub.s32 %s17, 2
      %s33 = sadd.s32 1, %s26
      %p34 = scmp.ge.s32.totalorder %s33, 1
      %s35 = scalar_select %p34, 0, %s33
      %s36 = sadd.s32 1, %s25
      %s37 = scalar_select %p34, %s36, %s25
      %p38 = scmp.ge.s32.totalorder %s37, 2
      %s39 = scalar_select %p38, 0, %s37
      %s40 = sadd.s32 1, %s24
      %s41 = scalar_select %p38, %s40, %s24
      %p42 = scmp.ge.s32.totalorder %s41, 2
      %s43 = scalar_select %p42, 0, %s41
      %s44 = sadd.s32 %s24, %s26
      %s45 = sadd.s32 %s43, %s35
      %s46 = ssub.s32 %s25, %s39
      %s47 = ssub.s32 %s44, %s45
      %s48 = sor.u32 %s46, %s47
      %p49 = scmp.eq.s32.totalorder %s48, 0
      %s51 = sadd.s32 %s50, 1
      %s52 = scalar_select %p49, %s50, %s51
      %p55 = pneg %p49
      %p56 = scmp.eq.s32.totalorder %s17, 3
      %p57 = por %p55, %p56
      %p58 = scmp.ne.s32.totalorder %s50, %s53
      %p59 = scmp.eq.s32.totalorder %s17, 0
      %p60 = por %p58, %p59
      %p61 = scmp.ne.s32.totalorder %s50, %s53
      %p62 = scmp.eq.s32.totalorder %s22, 3
      %p63 = por %p61, %p62
      %p64 = scmp.ne.s32.totalorder %s53, %s54
      %p65 = scmp.eq.s32.totalorder %s22, 0
      %p66 = por %p64, %p65
      %p67 = scmp.ne.s32.totalorder %s53, %s54
      %p68 = scmp.eq.s32.totalorder %s23, 3
      %p69 = por %p67, %p68
      %p71 = scmp.ne.s32.totalorder %s54, %s70
      %p72 = scmp.eq.s32.totalorder %s23, 0
      %p73 = por %p71, %p72
      %s74 = sadd.s32 %s24, %s26
      %s75 = sadd.s32 %s43, %s35
      %s76 = ssub.s32 %s25, %s39
      %s77 = ssub.s32 %s74, %s75
      %s78 = sor.u32 %s76, %s77
      %p79 = scmp.eq.s32.totalorder %s78, 0
      %s81 = sadd.s32 %s80, 1
      %s82 = scalar_select %p79, %s80, %s81
      %p85 = pneg %p79
      %p86 = scmp.eq.s32.totalorder %s17, 3
      %p87 = por %p85, %p86
      %p88 = scmp.ne.s32.totalorder %s80, %s83
      %p89 = scmp.eq.s32.totalorder %s17, 0
      %p90 = por %p88, %p89
      %p91 = scmp.ne.s32.totalorder %s80, %s83
      %p92 = scmp.eq.s32.totalorder %s22, 3
      %p93 = por %p91, %p92
      %p94 = scmp.ne.s32.totalorder %s83, %s84
      %p95 = scmp.eq.s32.totalorder %s22, 0
      %p96 = por %p94, %p95
      %p97 = scmp.ne.s32.totalorder %s83, %s84
      %p98 = scmp.eq.s32.totalorder %s23, 3
      %p99 = por %p97, %p98
      %p101 = scmp.ne.s32.totalorder %s84, %s100
      %p102 = scmp.eq.s32.totalorder %s23, 0
      %p103 = por %p101, %p102
      %s104 = ssub.s32 %s24, %s43
      %p105 = scmp.eq.s32.totalorder %s104, 0
      %s107 = sadd.s32 %s106, 1
      %s108 = scalar_select %p105, %s106, %s107
      %p111 = pneg %p105
      %p112 = scmp.eq.s32.totalorder %s17, 3
      %p113 = por %p111, %p112
      %p114 = scmp.ne.s32.totalorder %s106, %s109
      %p115 = scmp.eq.s32.totalorder %s17, 0
      %p116 = por %p114, %p115
      %p117 = scmp.ne.s32.totalorder %s106, %s109
      %p118 = scmp.eq.s32.totalorder %s22, 3
      %p119 = por %p117, %p118
      %p120 = scmp.ne.s32.totalorder %s109, %s110
      %p121 = scmp.eq.s32.totalorder %s22, 0
      %p122 = por %p120, %p121
      %p123 = scmp.ne.s32.totalorder %s109, %s110
      %p124 = scmp.eq.s32.totalorder %s23, 3
      %p125 = por %p123, %p124
      %p127 = scmp.ne.s32.totalorder %s110, %s126
      %p128 = scmp.eq.s32.totalorder %s23, 0
      %p129 = por %p127, %p128
      %p130 = scmp.le.s32.totalorder 1, %s17
      %p131 = scmp.lt.s32.totalorder %s17, 5
      %p132 = pnand %p130, %p131
      %p133 = pneg %p132
      // Predicated region
      $region9: #{tpu_custom_call.1} parent=5 // pred_check
        _
      $region10: #{tpu_custom_call.1} parent=5 // pred_check_branch
        %135 = sbr.rel (%p132) target = $region12
      $region11: #{tpu_custom_call.1} parent=5 // pred_region
        %s136 = ssub.s32 %s17, 1
      $region12: #{tpu_custom_call.1} parent=5 // pred_fallthru
        _
      %p137 = scmp.lt.s32.totalorder %s17, 4
      // Predicated region
      $region13: #{tpu_custom_call.1} parent=5 // pred_check
        %p138 = pneg %p137
      $region14: #{tpu_custom_call.1} parent=5 // pred_check_branch
        %140 = sbr.rel (%p138) target = $region16
      $region15: #{tpu_custom_call.1} parent=5 // pred_region
        // Predicated region
        $region17: #{tpu_custom_call.1} parent=15 // pred_check
          %p141 = pneg %p60
        $region18: #{tpu_custom_call.1} parent=15 // pred_check_branch
          %143 = sbr.rel (%p141) target = $region20
        $region19: #{tpu_custom_call.1} parent=15 // pred_region
          %s144 = sand.u32 %s50, 1
          %s145 = scalar_lea.sflag [#allocation7], %s144
          %s146 = sand.u32 %s50, 1
          %s147 = smul.addr %s146, 8
          %s148 = scalar_lea.vmem [#allocation6], %s147
          %s149 = sadd.s32 %s24, %s26
          %s150 = smul.u32 2, %s149
          %s152 = ssub.s32 128, 128
          %153 = vsyncadd %s145, %s152
          %s154 = smul.addr %s25, 4
          %s155 = sadd.s32 %s150, %s154
          %s156 = smul.addr %s155, 64
          %s157 = scalar_lea.hbm %s0, %s156
          %s159 = sshll.u32 %s148, 4
          %s160 = int_to_ptr.vmem [resolvable:$true] %s159
          %162 = dma.hbm_to_vmem [thread:$0]  %s157, 128, %s160, %s145
        $region20: #{tpu_custom_call.1} parent=15 // pred_fallthru
          _
        // Predicated region
        $region21: #{tpu_custom_call.1} parent=15 // pred_check
          %p163 = pneg %p90
        $region22: #{tpu_custom_call.1} parent=15 // pred_check_branch
          %165 = sbr.rel (%p163) target = $region24
        $region23: #{tpu_custom_call.1} parent=15 // pred_region
          %s166 = sand.u32 %s80, 1
          %s167 = scalar_lea.sflag [#allocation10], %s166
          %s168 = sand.u32 %s80, 1
          %s169 = smul.addr %s168, 2
          %s170 = scalar_lea.vmem [#allocation9], %s169
          %s171 = sadd.s32 %s24, %s26
          %s172 = smul.u32 2, %s171
          %s174 = ssub.s32 32, 32
          %175 = vsyncadd %s167, %s174
          %s176 = smul.addr %s25, 4
          %s177 = sadd.s32 %s172, %s176
          %s178 = smul.addr %s177, 16
          %s179 = scalar_lea.hbm %s1, %s178
          %s181 = sshll.u32 %s170, 4
          %s182 = int_to_ptr.vmem [resolvable:$true] %s181
          %184 = dma.hbm_to_vmem [thread:$0]  %s179, 32, %s182, %s167
        $region24: #{tpu_custom_call.1} parent=15 // pred_fallthru
          _
      $region16: #{tpu_custom_call.1} parent=5 // pred_fallthru
        _
      %p185 = scmp.le.s32.totalorder 1, %s17
      %p186 = scmp.lt.s32.totalorder %s17, 5
      %p187 = pnand %p185, %p186
      %p188 = pneg %p187
      // Predicated region
      $region25: #{tpu_custom_call.1} parent=5 // pred_check
        _
      $region26: #{tpu_custom_call.1} parent=5 // pred_check_branch
        %190 = sbr.rel (%p187) target = $region28
      $region27: #{tpu_custom_call.1} parent=5 // pred_region
        %s191 = ssub.s32 %s17, 1
        %s192 = sand.u32 %s53, 1
        %s193 = scalar_lea.sflag [#allocation7], %s192
        %s194 = sand.u32 %s53, 1
        %s195 = smul.addr %s194, 8
        %s196 = scalar_lea.vmem [#allocation6], %s195
        // Predicated region
        $region29: #{tpu_custom_call.1} parent=27 // pred_check
          %p197 = pneg %p66
        $region30: #{tpu_custom_call.1} parent=27 // pred_check_branch
          %199 = sbr.rel (%p197) target = $region32
        $region31: #{tpu_custom_call.1} parent=27 // pred_region
          %200 = dma.done %s193, 128
        $region32: #{tpu_custom_call.1} parent=27 // pred_fallthru
          _
        %s201 = sand.u32 %s83, 1
        %s202 = scalar_lea.sflag [#allocation10], %s201
        %s203 = sand.u32 %s83, 1
        %s204 = smul.addr %s203, 2
        %s205 = scalar_lea.vmem [#allocation9], %s204
        // Predicated region
        $region33: #{tpu_custom_call.1} parent=27 // pred_check
          %p206 = pneg %p96
        $region34: #{tpu_custom_call.1} parent=27 // pred_check_branch
          %208 = sbr.rel (%p206) target = $region36
        $region35: #{tpu_custom_call.1} parent=27 // pred_region
          %209 = dma.done %s202, 32
        $region36: #{tpu_custom_call.1} parent=27 // pred_fallthru
          _
        %s210 = sand.u32 %s53, 1
        %s211 = scalar_lea.sflag [#allocation7], %s210
        %s212 = sand.u32 %s53, 1
        %s213 = smul.addr %s212, 8
        %s214 = scalar_lea.vmem [#allocation6], %s213
        %p215 = pneg %p66
        %p216 = pneg %p63
        %s217 = sand.u32 %s83, 1
        %s218 = scalar_lea.sflag [#allocation10], %s217
        %s219 = sand.u32 %s83, 1
        %s220 = smul.addr %s219, 2
        %s221 = scalar_lea.vmem [#allocation9], %s220
        %p222 = pneg %p96
        %p223 = pneg %p93
        %p224 = pneg %p122
        %p225 = pneg %p119
        %s226 = sand.u32 %s109, 1
        %s227 = scalar_lea.sflag [#allocation8], %s226
        %s228 = sand.u32 %s109, 1
        %s229 = smul.addr %s228, 16
        %s230 = scalar_lea.vmem [#allocation11], %s229
        %s231 = sadd.s32 %s27, %s29
        %s232 = smul.u32 2, %s231
        %s233 = sadd.s32 %s27, %s29
        %s234 = smul.u32 2, %s233
        %p235 = scmp.eq.s32.totalorder %s28, 0
        %p236 = scmp.eq.s32.totalorder %s29, 0
        %p237 = pnand %p235, %p236
        %p238 = pneg %p237
        // Predicated region
        $region37: #{tpu_custom_call.1} parent=27 // pred_check
          _
        $region38: #{tpu_custom_call.1} parent=27 // pred_check_branch
          %240 = sbr.rel (%p237) target = $region40
        $region39: #{tpu_custom_call.1} parent=27 // pred_region
          %v241 = vlaneseq
          %vm242 = vcmp.ge.s32.totalorder %v241, 0
          %vm243 = vcmp.lt.s32.totalorder %v241, 256
          %vm244 = vmand %vm242, %vm243
          %245 = vst.msk [vmem:[#allocation2] sm:$0x3] %vm244, 0.0
          %246 = vst [vmem:[#allocation3] sm:$0xff] 0.0
          %247 = vst [vmem:[#allocation4] sm:$0xff] 0.0
          %248 = vst [vmem:[#allocation5] sm:$0xff] 0.0
        $region40: #{tpu_custom_call.1} parent=27 // pred_fallthru
          _
        %v249 = vld [vmem:[%s196] sm:$0xff]
        %v250 = vld [vmem:[%s205] sm:$0x3]
        %vm251 = vcmp.ne.s32.totalorder %v250, 0
        %v252 = vsel %vm251, 1, 0
        %v253 = vcvt.s32.f32 %v252
        %v254 = vlaneseq
        %v255 = vshrl.u32 %v254, 7
        %v256 = vlaneseq
        %v257 = vshrl.u32 %v256, 7
        %v258 = vsub.s32 0, %v257
        %v259 = vrot.slane %v250, %v258
        %v260 = vlaneseq
        %v261 = vshrl.u32 %v260, 7
        %v262 = vsub.s32 1, %v261
        %v263 = vrot.slane %v250, %v262
        %vm264 = vcmp.eq.s32.totalorder %v259, %v255
        %vm265 = vcmp.eq.s32.totalorder %v263, %v255
        %v266 = vsel %vm264, 1, 0
        %v267 = vsel %vm265, 1, 0
        %v268 = vcvt.s32.f32 %v266
        %v269 = vcvt.s32.f32 %v267
        %v270 = vand.u32 2147483647, %v249
        %v271 = vsub.f32 0.0, %v270
        %v272 = vmul.f32 %v271, 1.442695
        %v273 = vpow.pop %v272
        %v274 = vmul.f32 %v268, 2.0
        %v275 = vmul.f32 %v269, 2.0
        %v276 = vsub.f32 %v274, 1.0
        %v277 = vsub.f32 %v275, 1.0
        %v280 = vcombine.low %v276, %v277
        %v282 = vmul.f32 %v249, %v280
        %v283 = vsub.f32 0.0, %v282
        %v284 = vmax.f32 %v283, 0.0
        %v285 = vadd.f32 %v273, 1.0
        %v286 = vlog2.pop %v285
        %v287 = vmul.f32 %v286, 0.6931472
        %v288 = vadd.f32 %v284, %v287
        %v289 = vrcp.pop %v285
        %vm290 = vcmp.ge.f32.partialorder %v282, 0.0
        %v291 = vmul.f32 %v273, %v289
        %v292 = vsel %vm290, %v289, %v291
        %v293 = vsub.f32 1.0, %v292
        %v294 = vmul.f32 %v293, %v293
        %v295 = vld [vmem:[#allocation2] sm:$0x3]
        %v296 = vmul.f32 %v294, %v288
        %v298 = vlaneseq
        %v299 = vshrl.u32 %v298, 7
        %v300 = vsub.s32 0, %v299
        %v301 = vrot.slane %v253, %v300
        %v302 = vlaneseq
        %v303 = vshrl.u32 %v302, 7
        %v304 = vsub.s32 1, %v303
        %v305 = vrot.slane %v253, %v304
        %v308 = vcombine.low %v301, %v305
        %v310 = vmul.f32 %v296, %v308
        %v312 = vcombine.high %v310, %v310
        %vm314 = vcmask 1043456
        %v315 = vsel %vm314, %v310, 0.0
        %v316 = vrot.slane %v315, 4
        %v317 = vadd.f32 %v315, %v316
        %v318 = vrot.slane %v317, 2
        %v319 = vadd.f32 %v317, %v318
        %v320 = vrot.slane %v319, 1
        %v321 = vadd.f32 %v319, %v320
        %v322 = vsel %vm314, %v312, 0.0
        %v323 = vrot.slane %v322, 4
        %v324 = vadd.f32 %v322, %v323
        %v325 = vrot.slane %v324, 2
        %v326 = vadd.f32 %v324, %v325
        %v327 = vrot.slane %v326, 1
        %v328 = vadd.f32 %v326, %v327
        %v331 = vcombine.low %v321, %v328
        %v333 = vunpack.c.l.s4 1966171168
        %v334 = vunpack.c.0.s8 %v333
        %v335 = vlaneseq
        %v336 = vshrl.u32 %v335, 7
        %v337 = vsub.s32 %v334, %v336
        %v338 = vrot.slane %v331, %v337
        %v340 = vunpack.c.l.s4 1966171168
        %v341 = vunpack.c.0.s8 %v340
        %v342 = vlaneseq
        %v343 = vshrl.u32 %v342, 7
        %v344 = vsub.s32 %v341, %v343
        %v345 = vrot.slane %v338, %v344
        %v347 = vadd.f32 %v295, %v345
        %v348 = vlaneseq
        %vm349 = vcmp.ge.s32.totalorder %v348, 0
        %vm350 = vcmp.lt.s32.totalorder %v348, 256
        %vm351 = vmand %vm349, %vm350
        %352 = vst.msk [vmem:[#allocation2] sm:$0x3] %vm351, %v347
        %v354 = vcombine.high %v249, %v249
        %v356 = vsel %vm314, %v249, -inf
        %v357 = vrot.slane %v356, 4
        %v358 = vmax.f32 %v356, %v357
        %v359 = vrot.slane %v358, 2
        %v360 = vmax.f32 %v358, %v359
        %v361 = vrot.slane %v360, 1
        %v362 = vmax.f32 %v360, %v361
        %v363 = vsel %vm314, %v354, -inf
        %v364 = vrot.slane %v363, 4
        %v365 = vmax.f32 %v363, %v364
        %v366 = vrot.slane %v365, 2
        %v367 = vmax.f32 %v365, %v366
        %v368 = vrot.slane %v367, 1
        %v369 = vmax.f32 %v367, %v368
        %v372 = vcombine.low %v362, %v369
        %v374 = vsub.f32 %v249, %v372
        %v375 = vmul.f32 %v374, 1.442695
        %v376 = vpow.pop %v375
        %v378 = vcombine.high %v376, %v376
        %v380 = vsel %vm314, %v376, 0.0
        %v381 = vrot.slane %v380, 4
        %v382 = vadd.f32 %v380, %v381
        %v383 = vrot.slane %v382, 2
        %v384 = vadd.f32 %v382, %v383
        %v385 = vrot.slane %v384, 1
        %v386 = vadd.f32 %v384, %v385
        %v387 = vsel %vm314, %v378, 0.0
        %v388 = vrot.slane %v387, 4
        %v389 = vadd.f32 %v387, %v388
        %v390 = vrot.slane %v389, 2
        %v391 = vadd.f32 %v389, %v390
        %v392 = vrot.slane %v391, 1
        %v393 = vadd.f32 %v391, %v392
        %v394 = vrcp.pop %v386
        %v395 = vrcp.pop %v393
        %v398 = vcombine.low %v394, %v395
        %v400 = vmul.f32 %v376, %v398
        %v401 = vmul.f32 %v400, %v308
        %v402 = vmul.f32 %v268, %v301
        %v403 = vmul.f32 %v269, %v305
        %v404 = vld [vmem:[#allocation3] sm:$0xff]
        %v407 = vcombine.low %v402, %v403
        %v409 = vmul.f32 %v401, %v407
        %v410 = vadd.f32 %v404, %v409
        %411 = vst [vmem:[#allocation3] sm:$0xff] %v410
        %v412 = vld [vmem:[#allocation4] sm:$0xff]
        %v413 = vadd.f32 %v401, %v407
        %v414 = vadd.f32 %v412, %v413
        %415 = vst [vmem:[#allocation4] sm:$0xff] %v414
        %v416 = vld [vmem:[#allocation5] sm:$0xff]
        %v417 = vadd.f32 %v416, %v407
        %418 = vst [vmem:[#allocation5] sm:$0xff] %v417
        %p419 = scmp.eq.s32.totalorder %s28, 1
        %p420 = pnand %p419, %p236
        %p421 = pneg %p420
        // Predicated region
        $region41: #{tpu_custom_call.1} parent=27 // pred_check
          _
        $region42: #{tpu_custom_call.1} parent=27 // pred_check_branch
          %423 = sbr.rel (%p420) target = $region44
        $region43: #{tpu_custom_call.1} parent=27 // pred_region
          %v424 = vld [vmem:[#allocation3] sm:$0xff]
          %v426 = vcombine.high %v424, %v424
          %v428 = vsel %vm314, %v424, 0.0
          %v429 = vsel %vm314, %v426, 0.0
          %v430 = vadd.f32 %v428, %v429
          %431 = vadd.xlane.f32.xlu0 %v430
          %v432 = vpop.xlane.xlu0 %431
          %v433 = vld [vmem:[#allocation4] sm:$0xff]
          %v435 = vcombine.high %v433, %v433
          %v437 = vsel %vm314, %v433, 0.0
          %v438 = vsel %vm314, %v435, 0.0
          %v439 = vadd.f32 %v437, %v438
          %440 = vadd.xlane.f32.xlu0 %v439
          %v441 = vpop.xlane.xlu0 %440
          %v442 = vld [vmem:[#allocation5] sm:$0xff]
          %v444 = vcombine.high %v442, %v442
          %v446 = vsel %vm314, %v442, 0.0
          %v447 = vsel %vm314, %v444, 0.0
          %v448 = vadd.f32 %v446, %v447
          %449 = vadd.xlane.f32.xlu0 %v448
          %v450 = vpop.xlane.xlu0 %449
          %v451 = vld [vmem:[#allocation2] sm:$0x3]
          %v453 = vlaneseq
          %v454 = vshrl.u32 %v453, 7
          %v455 = vsub.s32 0, %v454
          %v456 = vrot.slane %v451, %v455
          %v457 = vlaneseq
          %v458 = vshrl.u32 %v457, 7
          %v459 = vsub.s32 1, %v458
          %v460 = vrot.slane %v451, %v459
          %vm463 = vcmask 1040384
          %v464 = vsel %vm463, %v456, 0.0
          %v465 = vsel %vm463, %v460, 0.0
          %v466 = vadd.f32 %v464, %v465
          %467 = vadd.xlane.f32.xlu0 %v466
          %v468 = vpop.xlane.xlu0 %467
          %v469 = vrot.slane %v468, 4
          %v470 = vadd.f32 %v468, %v469
          %v471 = vrot.slane %v470, 2
          %v472 = vadd.f32 %v470, %v471
          %v473 = vrot.slane %v472, 1
          %v474 = vadd.f32 %v472, %v473
          %s475 = vtos %v474
          %v476 = vadd.f32 %v432, 0.0
          %477 = vst [vmem:[%s230] sm:$0xf] %v476
          %v478 = vadd.f32 %v441, 0.0
          %s479 = scalar_lea.vmem %s230, 4 [#allocation11]
          %480 = vst [vmem:[%s479] sm:$0xf] %v478
          %v481 = vadd.f32 %v450, 0.0
          %s482 = scalar_lea.vmem %s230, 8 [#allocation11]
          %483 = vst [vmem:[%s482] sm:$0xf] %v481
          %v484 = vstv %s475
          %v485 = vadd.f32 %v484, 0.0
          %s486 = scalar_lea.vmem %s230, 12 [#allocation11]
          %487 = vst [vmem:[%s486] sm:$0xf] %v485
        $region44: #{tpu_custom_call.1} parent=27 // pred_fallthru
          _
        %s488 = sand.u32 %s109, 1
        %s489 = scalar_lea.sflag [#allocation8], %s488
        %s490 = sand.u32 %s109, 1
        %s491 = smul.addr %s490, 16
        %s492 = scalar_lea.vmem [#allocation11], %s491
        // Predicated region
        $region45: #{tpu_custom_call.1} parent=27 // pred_check
          %p493 = pneg %p119
        $region46: #{tpu_custom_call.1} parent=27 // pred_check_branch
          %495 = sbr.rel (%p493) target = $region48
        $region47: #{tpu_custom_call.1} parent=27 // pred_region
          %s497 = ssub.s32 256, 256
          %498 = vsyncadd %s489, %s497
          %s499 = smul.addr %s27, 4
          %s500 = smul.addr %s499, 64
          %s501 = scalar_lea.hbm %s2, %s500
          %s502 = sshll.u32 %s492, 4
          %s503 = int_to_ptr.vmem [resolvable:$true] %s502
          %508 = dma.vmem_to_hbm [thread:$0]  %s503, 256, %s501, %s489, 64, 64, 4
        $region48: #{tpu_custom_call.1} parent=27 // pred_fallthru
          _
      $region28: #{tpu_custom_call.1} parent=5 // pred_fallthru
        _
      %p509 = scmp.le.s32.totalorder 2, %s17
      // Predicated region
      $region49: #{tpu_custom_call.1} parent=5 // pred_check
        %p510 = pneg %p509
      $region50: #{tpu_custom_call.1} parent=5 // pred_check_branch
        %512 = sbr.rel (%p510) target = $region52
      $region51: #{tpu_custom_call.1} parent=5 // pred_region
        %s513 = ssub.s32 %s17, 2
        // Predicated region
        $region53: #{tpu_custom_call.1} parent=51 // pred_check
          %p514 = pneg %p125
        $region54: #{tpu_custom_call.1} parent=51 // pred_check_branch
          %516 = sbr.rel (%p514) target = $region56
        $region55: #{tpu_custom_call.1} parent=51 // pred_region
          %s517 = sand.u32 %s110, 1
          %s518 = scalar_lea.sflag [#allocation8], %s517
          %s519 = sand.u32 %s110, 1
          %s520 = smul.addr %s519, 16
          %s521 = scalar_lea.vmem [#allocation11], %s520
          %522 = dma.done %s518, 256
        $region56: #{tpu_custom_call.1} parent=51 // pred_fallthru
          _
      $region52: #{tpu_custom_call.1} parent=5 // pred_fallthru
        _
    $region6: #{tpu_custom_call.1} parent=1 // loop_footer
      %s21 = sadd.s32 1, %s17
    $region7: #{tpu_custom_call.1} parent=1 // loop_footer_branch
      %16 = sbr.rel target = $region3
    $region8: #{tpu_custom_call.1} parent=1 // loop_exit
      _
    %523 = vsyncpa [#allocation7], 1
    %s524 = scalar_lea.sflag [#allocation7], 1
    %525 = vsyncpa %s524, 1
    %526 = vsyncpa [#allocation10], 1
    %s527 = scalar_lea.sflag [#allocation10], 1
    %528 = vsyncpa %s527, 1
    %529 = vsyncpa [#allocation8], 1
    %s530 = scalar_lea.sflag [#allocation8], 1
    %531 = vsyncpa %s530, 1

</llo_original>
